<compile_context>
chip_gen: v6e
topology: v6e:2x2x1
jax: 0.10.0
libtpu: 0.0.40
codegen_flags: <defaults>
</compile_context>

<pallas_src>
import math

import jax
import jax.numpy as jnp
from jax.experimental import pallas as pl
from jax.experimental.pallas import tpu as pltpu


def _glu_silu_split_kernel(out_half_ref, gate_ref, o_ref):
    """Lane-aligned path: halves arrive as separate (tile_rows, H) blocks."""
    outputs = out_half_ref[...]
    gate = gate_ref[...].astype(jnp.float32)
    # SiLU(g) = g * sigmoid(g). Activation in f32, product in native dtype.
    act = (gate * jax.nn.sigmoid(gate)).astype(outputs.dtype)
    o_ref[...] = (outputs * act).astype(o_ref.dtype)


def _glu_silu_fused_kernel(x_ref, o_ref):
    """Fallback (H not 128-aligned): single (tile_rows, 2H) block, slice in-kernel."""
    h = o_ref.shape[-1]
    x = x_ref[...]
    outputs = x[:, :h]
    gate = x[:, h:].astype(jnp.float32)
    act = (gate * jax.nn.sigmoid(gate)).astype(outputs.dtype)
    o_ref[...] = (outputs * act).astype(o_ref.dtype)


def _choose_tile_rows(rows, h, itemsize, vmem_budget_bytes):
    """Pick tile_rows so the double-buffered block footprint fits the budget.

    Per grid step VMEM ~= 2 bufs x (two H-wide input halves) + 2 bufs x (H-wide
    output) = 6 * tile_rows * H * itemsize. Budget is kept well under the 32 MiB
    scoped limit so it is safe on v7x (64 MiB physical VMEM) as well.
    """
    bytes_per_row = 6 * h * itemsize
    t = max(vmem_budget_bytes // max(bytes_per_row, 1), 8)
    # Cap so large inputs still produce many grid steps (v7x megacore sharding).
    t = min(t, 1024)
    t = (t // 8) * 8  # sublane alignment
    rows8 = ((rows + 7) // 8) * 8
    return max(min(t, rows8), 8)


def glu_pallas(x, *, activation="silu", dim=-1, tile_rows=None,
               vmem_budget_bytes=16 * 1024 * 1024):
    """GLU with SiLU gate. Splits `x` in half along `dim`; fast path is dim=-1."""
    if activation not in ("silu", "swish"):
        # TODO(synk): only the SiLU/Swish gate is implemented in-kernel (the
        # Conformer usage); gelu/relu/mish/prelu/elu would need their own path.
        raise NotImplementedError(activation)

    ndim = x.ndim
    d = dim % ndim
    if d != ndim - 1:
        # Non-lane split axis: move it last (XLA transpose outside the kernel).
        y = glu_pallas(jnp.moveaxis(x, d, -1), activation=activation, dim=-1,
                       tile_rows=tile_rows, vmem_budget_bytes=vmem_budget_bytes)
        return jnp.moveaxis(y, -1, d)

    *lead, two_h = x.shape
    assert two_h % 2 == 0, "split dim must be even for chunk(2)"
    h = two_h // 2
    rows = math.prod(lead) if lead else 1
    x2d = x.reshape(rows, two_h)

    if tile_rows is None:
        tile_rows = _choose_tile_rows(rows, h, x.dtype.itemsize, vmem_budget_bytes)

    grid = (pl.cdiv(rows, tile_rows),)  # ragged last block is clipped by Pallas
    compiler_params = pltpu.CompilerParams(
        dimension_semantics=("parallel",),
        vmem_limit_bytes=32 * 1024 * 1024,
    )

    if h % 128 == 0:
        # Two lane-aligned half-width input blocks: block index 0 -> outputs
        # half, block index 1 -> gate half. No in-VMEM slice / lane rotation.
        out2d = pl.pallas_call(
            _glu_silu_split_kernel,
            out_shape=jax.ShapeDtypeStruct((rows, h), x.dtype),
            grid_spec=pltpu.PrefetchScalarGridSpec(
                num_scalar_prefetch=0,
                grid=grid,
                in_specs=[
                    pl.BlockSpec((tile_rows, h), lambda i: (i, 0)),
                    pl.BlockSpec((tile_rows, h), lambda i: (i, 1)),
                ],
                out_specs=pl.BlockSpec((tile_rows, h), lambda i: (i, 0)),
            ),
            compiler_params=compiler_params,
        )(x2d, x2d)
    else:
        # TODO(synk): H not 128-aligned falls back to a fused (tile_rows, 2H)
        # block with in-kernel slicing (masked stores for H<128); prefer
        # 128-aligned H for full store bandwidth.
        out2d = pl.pallas_call(
            _glu_silu_fused_kernel,
            out_shape=jax.ShapeDtypeStruct((rows, h), x.dtype),
            grid_spec=pltpu.PrefetchScalarGridSpec(
                num_scalar_prefetch=0,
                grid=grid,
                in_specs=[pl.BlockSpec((tile_rows, two_h), lambda i: (i, 0))],
                out_specs=pl.BlockSpec((tile_rows, h), lambda i: (i, 0)),
            ),
            compiler_params=compiler_params,
        )(x2d)

    return out2d.reshape(*lead, h)


def glu_reference(x):
    h = x.shape[-1] // 2
    outputs, gate = x[..., :h], x[..., h:]
    return outputs * jax.nn.silu(gate)


if __name__ == "__main__":
    B, T = 2, 8

    # Case 1: lane-aligned hidden (H = 128, last dim 256) -> split-spec path.
    H1 = 128
    x1 = jax.random.normal(jax.random.PRNGKey(0), (B, T, 2 * H1), dtype=jnp.float32)
    out1 = jax.block_until_ready(glu_pallas(x1, activation="silu"))
    ref1 = glu_reference(x1)
    assert out1.shape == (B, T, H1), out1.shape
    assert jnp.allclose(out1, ref1, atol=1e-5, rtol=1e-5), float(
        jnp.max(jnp.abs(out1 - ref1)))

    # Case 2: small hidden (H = 32, last dim 64) -> fused fallback path.
    H2 = 32
    x2 = jax.random.normal(jax.random.PRNGKey(0), (B, T, 2 * H2), dtype=jnp.float32)
    out2 = jax.block_until_ready(glu_pallas(x2, activation="silu"))
    ref2 = glu_reference(x2)
    assert out2.shape == (B, T, H2), out2.shape
    assert jnp.allclose(out2, ref2, atol=1e-5, rtol=1e-5), float(
        jnp.max(jnp.abs(out2 - ref2)))

    print("KERNEL_OK")
</pallas_src>

<mosaic_0001>
module attributes {stable_mosaic.version = 11 : i64} {
  func.func @_glu_silu_split_kernel(%arg0: i32, %arg1: memref<16x128xf32, #tpu.memory_space<vmem>>, %arg2: memref<16x128xf32, #tpu.memory_space<vmem>>, %arg3: memref<16x128xf32, #tpu.memory_space<vmem>>) attributes {dimension_semantics = [#tpu.dimension_semantics<parallel>], iteration_bounds = array<i64: 1>, scalar_prefetch = 0 : i64, scratch_operands = 0 : i64, tpu.core_type = #tpu.core_type<tc>, window_params = [{transform_indices = @transform_0, window_bounds = array<i64: 16, 128>}, {transform_indices = @transform_1, window_bounds = array<i64: 16, 128>}, {transform_indices = @transform_2, window_bounds = array<i64: 16, 128>}]} {
    %c0 = arith.constant 0 : index
    %c0_0 = arith.constant 0 : index
    %0 = vector.load %arg1[%c0, %c0_0] : memref<16x128xf32, #tpu.memory_space<vmem>>, vector<16x128xf32>
    %c0_1 = arith.constant 0 : index
    %c0_2 = arith.constant 0 : index
    %1 = vector.load %arg2[%c0_1, %c0_2] : memref<16x128xf32, #tpu.memory_space<vmem>>, vector<16x128xf32>
    %2 = arith.negf %1 : vector<16x128xf32>
    %3 = math.exp %2 : vector<16x128xf32>
    %cst = arith.constant 1.000000e+00 : f32
    %4 = vector.broadcast %cst : f32 to vector<16x128xf32>
    %5 = arith.addf %4, %3 : vector<16x128xf32>
    %6 = arith.divf %4, %5 : vector<16x128xf32>
    %7 = arith.mulf %1, %6 : vector<16x128xf32>
    %8 = arith.mulf %0, %7 : vector<16x128xf32>
    %c0_3 = arith.constant 0 : index
    %c0_4 = arith.constant 0 : index
    %9 = vector.load %arg3[%c0_3, %c0_4] : memref<16x128xf32, #tpu.memory_space<vmem>>, vector<16x128xf32>
    tpu.vector_store %arg3[%c0_3, %c0_4], %8 {strides = array<i32>} : memref<16x128xf32, #tpu.memory_space<vmem>>, vector<16x128xf32>,
    return
  }
  func.func @transform_0(%arg0: i32) -> (i32, i32) {
    %c0_i32 = arith.constant 0 : i32
    %c0_i32_0 = arith.constant 0 : i32
    return %arg0, %c0_i32 : i32, i32
  }
  func.func @transform_1(%arg0: i32) -> (i32, i32) {
    %c1_i32 = arith.constant 1 : i32
    %c0_i32 = arith.constant 0 : i32
    return %arg0, %c1_i32 : i32, i32
  }
  func.func @transform_2(%arg0: i32) -> (i32, i32) {
    %c0_i32 = arith.constant 0 : i32
    %c0_i32_0 = arith.constant 0 : i32
    return %arg0, %c0_i32 : i32, i32
  }
}

</mosaic_0001>

<llo_original>
// kernel: tpu_custom_call.1
$region0: #{tpu_custom_call.1}
  #allocation0 [shape = 'u32[]', space=smem, size = 0x4, offset = 0x4, fixed_abs, tag = 'smem constant byte address 0x4 - core index']
  #allocation1 [shape = 'u32[144,128]{1,0:T(1,128)}', space=vmem, size = 0x12000, scoped, tag = 'internal scratch']
  %s0 = inlined_call_operand.hbm [shape: f32[16,256], index: 0, kind: input, shape index: {}]
  %s1 = inlined_call_operand.hbm [shape: f32[16,256], index: 1, kind: input, shape index: {}]
  %s2 = inlined_call_operand.hbm [shape: f32[16,128], index: 2, kind: output, shape index: {}]
  %s3 = sld [smem:[#allocation0]]
  $region26: #{tpu_custom_call.1} parent=0
    _
  %s5 = ssub.s32 1, %s3
  %s6 = scalar_select 0, %s5, %s3
  $region1: #{tpu_custom_call.1} parent=0
    #allocation2 [shape = 'u8[8192]{0}', space=vmem, size = 0x2000, scoped, tag = 'input window, operand 0, single buffered']
    #allocation3 [shape = 's32[1]{0}', space=sflag, size = 0x4, scoped, tag = 'scoped memory for tpu_custom_call.1']
    #allocation4 [shape = 's32[1]{0}', space=sflag, size = 0x4, scoped, tag = 'scoped memory for tpu_custom_call.1']
    #allocation5 [shape = 'u8[8192]{0}', space=vmem, size = 0x2000, scoped, tag = 'input window, operand 1, single buffered']
    #allocation6 [shape = 's32[1]{0}', space=sflag, size = 0x4, scoped, tag = 'scoped memory for tpu_custom_call.1']
    #allocation7 [shape = 'u8[8192]{0}', space=vmem, size = 0x2000, scoped, tag = 'output window, operand 0, single buffered']
    %7 = vsyncpa [#allocation3], 0
    %8 = vsyncpa [#allocation6], 0
    %9 = vsyncpa [#allocation4], 0
    // Predicated region
    $region2: #{tpu_custom_call.1} parent=1 // pred_check
      _
    $region3: #{tpu_custom_call.1} parent=1 // pred_check_branch
      %11 = sbr.rel (0) target = $region5
    $region4: #{tpu_custom_call.1} parent=1 // pred_region
      %s13 = ssub.s32 256, 256
      %14 = vsyncadd [#allocation3], %s13
      %s15 = sshll.u32 [#allocation2], 4
      %s16 = int_to_ptr.vmem [resolvable:$true] %s15
      %21 = dma.hbm_to_vmem [thread:$0]  %s0, 256, %s16, [#allocation3], 256, 128, 8
    $region5: #{tpu_custom_call.1} parent=1 // pred_fallthru
      _
    // Predicated region
    $region6: #{tpu_custom_call.1} parent=1 // pred_check
      _
    $region7: #{tpu_custom_call.1} parent=1 // pred_check_branch
      %23 = sbr.rel (0) target = $region9
    $region8: #{tpu_custom_call.1} parent=1 // pred_region
      %s25 = ssub.s32 256, 256
      %26 = vsyncadd [#allocation6], %s25
      %s27 = scalar_lea.hbm %s1, 128
      %s28 = sshll.u32 [#allocation5], 4
      %s29 = int_to_ptr.vmem [resolvable:$true] %s28
      %34 = dma.hbm_to_vmem [thread:$0]  %s27, 256, %s29, [#allocation6], 256, 128, 8
    $region9: #{tpu_custom_call.1} parent=1 // pred_fallthru
      _
    // Predicated region
    $region10: #{tpu_custom_call.1} parent=1 // pred_check
      _
    $region11: #{tpu_custom_call.1} parent=1 // pred_check_branch
      %36 = sbr.rel (0) target = $region13
    $region12: #{tpu_custom_call.1} parent=1 // pred_region
      %37 = dma.done [#allocation3], 256
    $region13: #{tpu_custom_call.1} parent=1 // pred_fallthru
      _
    // Predicated region
    $region14: #{tpu_custom_call.1} parent=1 // pred_check
      _
    $region15: #{tpu_custom_call.1} parent=1 // pred_check_branch
      %39 = sbr.rel (0) target = $region17
    $region16: #{tpu_custom_call.1} parent=1 // pred_region
      %40 = dma.done [#allocation6], 256
    $region17: #{tpu_custom_call.1} parent=1 // pred_fallthru
      _
    %v41 = vld [vmem:[#allocation2] sm:$0xff]
    %v42 = vld [vmem:[#allocation2 + $0x8] sm:$0xff]
    %v43 = vld [vmem:[#allocation5] sm:$0xff]
    %v44 = vld [vmem:[#allocation5 + $0x8] sm:$0xff]
    %v45 = vxor.u32 %v43, 2147483648
    %v46 = vxor.u32 %v44, 2147483648
    %v47 = vmul.f32 %v45, 1.442695
    %v48 = vpow.pop %v47
    %v49 = vmul.f32 %v46, 1.442695
    %v50 = vpow.pop %v49
    %v51 = vadd.f32 %v48, 1.0
    %v52 = vadd.f32 %v50, 1.0
    %v53 = vrcp.pop %v51
    %v54 = vmul.f32 1.0, %v53
    %v55 = vrcp.pop %v52
    %v56 = vmul.f32 1.0, %v55
    %v57 = vmul.f32 %v43, %v54
    %v58 = vmul.f32 %v44, %v56
    %v59 = vmul.f32 %v41, %v57
    %v60 = vmul.f32 %v42, %v58
    %61 = vst [vmem:[#allocation7] sm:$0xff] %v59
    %62 = vst [vmem:[#allocation7 + $0x8] sm:$0xff] %v60
    // Predicated region
    $region18: #{tpu_custom_call.1} parent=1 // pred_check
      _
    $region19: #{tpu_custom_call.1} parent=1 // pred_check_branch
      %64 = sbr.rel (0) target = $region21
    $region20: #{tpu_custom_call.1} parent=1 // pred_region
      %s66 = ssub.s32 256, 256
      %67 = vsyncadd [#allocation4], %s66
      %s68 = sshll.u32 [#allocation7], 4
      %s69 = int_to_ptr.vmem [resolvable:$true] %s68
      %74 = dma.vmem_to_hbm [thread:$0]  %s69, 256, %s2, [#allocation4], 128, 128, 8
    $region21: #{tpu_custom_call.1} parent=1 // pred_fallthru
      _
    // Predicated region
    $region22: #{tpu_custom_call.1} parent=1 // pred_check
      _
    $region23: #{tpu_custom_call.1} parent=1 // pred_check_branch
      %76 = sbr.rel (0) target = $region25
    $region24: #{tpu_custom_call.1} parent=1 // pred_region
      %77 = dma.done [#allocation4], 256
    $region25: #{tpu_custom_call.1} parent=1 // pred_fallthru
      _
    %78 = vsyncpa [#allocation3], 1
    %79 = vsyncpa [#allocation6], 1
    %80 = vsyncpa [#allocation4], 1

</llo_original>
